<compile_context>
chip_gen: v6e
topology: v6e:2x2x1
jax: 0.10.0
libtpu: 0.0.40
codegen_flags: <defaults>
</compile_context>

<pallas_src>
import functools

import jax
import jax.numpy as jnp
import numpy as np
from jax.experimental import pallas as pl
from jax.experimental.pallas import tpu as pltpu


def _box_cxcywh_to_xyxy(b):
    cx, cy, w, h = jnp.split(b, 4, axis=-1)
    return jnp.concatenate([cx - 0.5 * w, cy - 0.5 * h, cx + 0.5 * w, cy + 0.5 * h], -1)


# -----------------------------------------------------------------------------
# Pallas kernel: one grid step == one tile of TB images folded into a single
# lane-dense slab.  Writes per-tile partial sums; wrapper reduces/normalizes.
# -----------------------------------------------------------------------------
def _criterion_kernel(logits_ref, pred_ref, match_q_ref, match_l_ref,
                      labels_ref, tgt_ref, out_ref, *, alpha, gamma):
    i = pl.program_id(0)

    x = logits_ref[0].astype(jnp.float32)   # (QQ, K)  logits, native dtype in HBM
    pred = pred_ref[0]                      # (8, QQ)  rows: abs xyxy | norm xyxy
    mq = match_q_ref[0]                     # (QQ, 1)  int32 flat gt idx or -1
    ml = match_l_ref[0]                     # (1, QQ)  same, queries on lanes
    labels = labels_ref[0]                  # (TT, 1)  int32 class ids
    tgt = tgt_ref[0]                        # (8, TT)  rows: norm xyxy | abs xyxy

    QQ, K = x.shape
    TT = labels.shape[0]

    # ---- classification targets: one MXU gather-matmul builds the one-hot ----
    # match == -1 never equals iota in [0, TT) -> unmatched rows are all-zero
    # (== background with the K+1-th column dropped).  0/1 values are exact bf16.
    G = (mq == jax.lax.broadcasted_iota(jnp.int32, (QQ, TT), 1)).astype(jnp.bfloat16)
    lab_oh = (labels == jax.lax.broadcasted_iota(jnp.int32, (TT, K), 1)).astype(jnp.bfloat16)
    t = jnp.dot(G, lab_oh, preferred_element_type=jnp.float32)        # (QQ, K)

    # ---- sigmoid focal loss: one sigmoid + one log per logit ----
    p = jax.nn.sigmoid(x)
    # BCE-with-logits: max(x,0) - x*t + log1p(exp(-|x|)) == max(x,0) - x*t - log(max(p, 1-p))
    ce = jnp.maximum(x, 0.0) - x * t - jnp.log(jnp.maximum(p, 1.0 - p))
    # 1 - p_t  with  p_t = p*t + (1-p)*(1-t)  folded: 1 - p_t = p + t*(1 - 2p)
    one_minus_pt = p + t * (1.0 - 2.0 * p)
    if float(gamma) == 2.0:
        mod = one_minus_pt * one_minus_pt
    else:
        mod = one_minus_pt ** gamma
    focal = ce * mod
    if alpha >= 0:
        # alpha*t + (1-alpha)*(1-t) folded into one FMA: (1-alpha) + (2*alpha-1)*t
        focal = focal * ((1.0 - alpha) + (2.0 * alpha - 1.0) * t)
    focal_sum = jnp.sum(focal)

    # ---- boxes: lane-dense gather (coords x queries) of matched targets ----
    G_T = (ml == jax.lax.broadcasted_iota(jnp.int32, (TT, QQ), 0)).astype(jnp.float32)
    gath = jnp.dot(tgt, G_T, preferred_element_type=jnp.float32)      # (8, QQ)

    matched_b = ml >= 0                                               # (1, QQ) bool
    matched = matched_b.astype(jnp.float32)

    # L1 on normalized coords (pred rows 4:8 vs gathered target rows 0:4):
    # reduce over the 4 coords first, then mask (QQ multiplies instead of 4*QQ).
    l1 = jnp.abs(pred[4:8, :] - gath[0:4, :])                         # (4, QQ)
    l1_sum = jnp.sum(jnp.sum(l1, axis=0, keepdims=True) * matched)

    # GIoU on absolute coords (pred rows 0:4 vs gathered target rows 4:8).
    sx0 = pred[0:1, :]; sy0 = pred[1:2, :]; sx1 = pred[2:3, :]; sy1 = pred[3:4, :]
    tx0 = gath[4:5, :]; ty0 = gath[5:6, :]; tx1 = gath[6:7, :]; ty1 = gath[7:8, :]
    area_s = (sx1 - sx0) * (sy1 - sy0)
    area_t = (tx1 - tx0) * (ty1 - ty0)
    iw = jnp.maximum(jnp.minimum(sx1, tx1) - jnp.maximum(sx0, tx0), 0.0)
    ih = jnp.maximum(jnp.minimum(sy1, ty1) - jnp.maximum(sy0, ty0), 0.0)
    inter = iw * ih
    union = area_s + area_t - inter
    iou = inter / union          # NOTE: no eps, matches the PyTorch reference
    area_c = (jnp.maximum(sx1, tx1) - jnp.minimum(sx0, tx0)) * \
             (jnp.maximum(sy1, ty1) - jnp.minimum(sy0, ty0))
    giou = iou - (area_c - union) / area_c
    giou_sum = jnp.sum(jnp.where(matched_b, 1.0 - giou, 0.0))

    n_matched = jnp.sum(matched)

    # Per-tile partial sums; final reduce + normalize in the wrapper.
    out_ref[i, 0] = focal_sum
    out_ref[i, 1] = l1_sum
    out_ref[i, 2] = giou_sum
    out_ref[i, 3] = n_matched


# -----------------------------------------------------------------------------
# Wrapper: layout plumbing (fold batch, lane-dense slabs, cxcywh->xyxy) + call.
# -----------------------------------------------------------------------------
def set_criterion_dynamic_k(pred_logits, pred_boxes, match_gt, tgt_labels,
                            tgt_boxes_cxcywh, tgt_boxes_xyxy, image_whwh,
                            *, alpha=0.25, gamma=2.0, batch_tile=None):
    B, N, K = pred_logits.shape
    T = tgt_labels.shape[1]
    tb = B if batch_tile is None else int(batch_tile)
    assert B % tb == 0, "batch_tile must divide the batch size"
    nt = B // tb
    QQ = tb * N
    TT = tb * T
    f32 = jnp.float32

    # Pred-box slab, queries on the lane dim: rows [abs xyxy ; normalized xyxy].
    boxes_abs = pred_boxes.astype(f32)
    boxes_norm = boxes_abs / image_whwh.astype(f32)[:, None, :]
    pred_slab = jnp.concatenate([boxes_abs, boxes_norm], axis=-1)      # (B, N, 8)
    pred_slab = pred_slab.reshape(nt, QQ, 8).transpose(0, 2, 1)        # (nt, 8, QQ)

    # Match indices flattened per tile (offset by in-tile batch index); -1 == unmatched.
    batch_in_tile = (jnp.arange(B, dtype=jnp.int32) % tb)[:, None]     # (B, 1)
    m = match_gt.astype(jnp.int32)
    m_global = jnp.where(m >= 0, m + batch_in_tile * T, -1)            # (B, N)
    m_flat = m_global.reshape(nt, QQ)
    match_q = m_flat.reshape(nt, QQ, 1)
    match_l = m_flat.reshape(nt, 1, QQ)

    labels_p = tgt_labels.astype(jnp.int32).reshape(nt, TT, 1)

    # Target slab, targets on the lane dim: rows [norm xyxy (for L1) ; abs xyxy (for GIoU)].
    tgt_norm_xyxy = _box_cxcywh_to_xyxy(tgt_boxes_cxcywh.astype(f32))  # (B, T, 4)
    tgt_slab = jnp.concatenate([tgt_norm_xyxy, tgt_boxes_xyxy.astype(f32)], axis=-1)
    tgt_slab = tgt_slab.reshape(nt, TT, 8).transpose(0, 2, 1)          # (nt, 8, TT)

    # Logits stay in their native dtype (no wrapper cast); fold batch into rows.
    logits_f = pred_logits.reshape(nt, QQ, K)

    kernel = functools.partial(_criterion_kernel, alpha=float(alpha), gamma=float(gamma))

    partials = pl.pallas_call(
        kernel,
        out_shape=jax.ShapeDtypeStruct((nt, 4), jnp.float32),
        grid_spec=pltpu.PrefetchScalarGridSpec(
            num_scalar_prefetch=0,
            grid=(nt,),
            in_specs=[
                pl.BlockSpec((1, QQ, K), lambda i: (i, 0, 0)),
                pl.BlockSpec((1, 8, QQ), lambda i: (i, 0, 0)),
                pl.BlockSpec((1, QQ, 1), lambda i: (i, 0, 0)),
                pl.BlockSpec((1, 1, QQ), lambda i: (i, 0, 0)),
                pl.BlockSpec((1, TT, 1), lambda i: (i, 0, 0)),
                pl.BlockSpec((1, 8, TT), lambda i: (i, 0, 0)),
            ],
            out_specs=pl.BlockSpec(memory_space=pltpu.MemorySpace.SMEM),
        ),
        compiler_params=pltpu.CompilerParams(dimension_semantics=("arbitrary",)),
    )(logits_f, pred_slab, match_q, match_l, labels_p, tgt_slab)

    sums = jnp.sum(partials, axis=0)                 # [focal, l1, giou, n_matched]
    denom = jnp.maximum(sums[3], 1.0)
    return {"loss_ce": sums[0] / denom,
            "loss_bbox": sums[1] / denom,
            "loss_giou": sums[2] / denom}


# -----------------------------------------------------------------------------
# Pure-JAX reference (mirrors the PyTorch forward semantics)
# -----------------------------------------------------------------------------
def _reference(pred_logits, pred_boxes, match_gt, tgt_labels,
               tgt_boxes_cxcywh, tgt_boxes_xyxy, image_whwh, alpha=0.25, gamma=2.0):
    B, N, K = pred_logits.shape
    matched = match_gt >= 0
    safe = jnp.maximum(match_gt, 0)

    gathered_labels = jnp.take_along_axis(tgt_labels, safe, axis=1)
    target_classes = jnp.where(matched, gathered_labels, K)
    onehot = jax.nn.one_hot(target_classes, K + 1, dtype=jnp.float32)[..., :K]

    x = pred_logits.astype(jnp.float32)
    p = jax.nn.sigmoid(x)
    ce = jnp.maximum(x, 0.0) - x * onehot + jnp.log1p(jnp.exp(-jnp.abs(x)))
    p_t = p * onehot + (1.0 - p) * (1.0 - onehot)
    focal = ce * (1.0 - p_t) ** gamma
    focal = (alpha * onehot + (1.0 - alpha) * (1.0 - onehot)) * focal

    n = jnp.sum(matched.astype(jnp.float32))
    denom = jnp.maximum(n, 1.0)
    loss_ce = jnp.sum(focal) / denom

    tgt_c_g = jnp.take_along_axis(tgt_boxes_cxcywh, safe[..., None], axis=1)
    tgt_x_g = jnp.take_along_axis(tgt_boxes_xyxy, safe[..., None], axis=1)
    src_norm = pred_boxes.astype(jnp.float32) / image_whwh[:, None, :]
    l1 = jnp.abs(src_norm - _box_cxcywh_to_xyxy(tgt_c_g)).sum(-1) * matched
    loss_bbox = jnp.sum(l1) / denom

    pb = pred_boxes.astype(jnp.float32)
    sx0, sy0, sx1, sy1 = [pb[..., i] for i in range(4)]
    tx0, ty0, tx1, ty1 = [tgt_x_g[..., i] for i in range(4)]
    area_s = (sx1 - sx0) * (sy1 - sy0)
    area_t = (tx1 - tx0) * (ty1 - ty0)
    iw = jnp.maximum(jnp.minimum(sx1, tx1) - jnp.maximum(sx0, tx0), 0.0)
    ih = jnp.maximum(jnp.minimum(sy1, ty1) - jnp.maximum(sy0, ty0), 0.0)
    inter = iw * ih
    union = area_s + area_t - inter
    iou = inter / union
    cw = jnp.maximum(sx1, tx1) - jnp.minimum(sx0, tx0)
    chh = jnp.maximum(sy1, ty1) - jnp.minimum(sy0, ty0)
    area_c = cw * chh
    giou = iou - (area_c - union) / area_c
    loss_giou = jnp.sum(jnp.where(matched, 1.0 - giou, 0.0)) / denom
    return {"loss_ce": loss_ce, "loss_bbox": loss_bbox, "loss_giou": loss_giou}


# -----------------------------------------------------------------------------
if __name__ == "__main__":
    key = jax.random.PRNGKey(0)
    B, N, K, T = 2, 16, 8, 8   # batch, queries, classes, padded targets
    k1, k2, k3, k4, k5, k6 = jax.random.split(key, 6)

    # logits kept in bf16 (native activation dtype) — kernel upcasts internally
    pred_logits = jax.random.normal(k1, (B, N, K), dtype=jnp.float32).astype(jnp.bfloat16)

    img_wh = jnp.array([[640.0, 480.0], [512.0, 512.0]], dtype=jnp.float32)
    image_whwh = jnp.concatenate([img_wh, img_wh], axis=-1)              # (B, 4)

    # targets: normalized cxcywh and absolute xyxy
    cxcy = jax.random.uniform(k2, (B, T, 2), minval=0.3, maxval=0.7)
    wh = jax.random.uniform(k3, (B, T, 2), minval=0.1, maxval=0.3)
    tgt_boxes_cxcywh = jnp.concatenate([cxcy, wh], axis=-1)
    tgt_boxes_xyxy = _box_cxcywh_to_xyxy(tgt_boxes_cxcywh) * image_whwh[:, None, :]
    tgt_labels = jax.random.randint(k4, (B, T), 0, K)

    # predictions: absolute xyxy boxes
    pcxcy = jax.random.uniform(k5, (B, N, 2), minval=0.2, maxval=0.8)
    pwh = jax.random.uniform(k6, (B, N, 2), minval=0.05, maxval=0.4)
    pred_boxes = _box_cxcywh_to_xyxy(jnp.concatenate([pcxcy, pwh], -1)) * image_whwh[:, None, :]

    # dense dynamic-K matcher result (deterministic): -1 == unmatched query
    match_np = -np.ones((B, N), dtype=np.int32)
    for q in range(10):
        match_np[0, q] = q % 5      # batch 0: 5 gt, multiple queries per gt
    for q in range(2, 8):
        match_np[1, q] = q % 3      # batch 1: 3 gt
    match_gt = jnp.asarray(match_np)

    losses = set_criterion_dynamic_k(pred_logits, pred_boxes, match_gt, tgt_labels,
                                     tgt_boxes_cxcywh, tgt_boxes_xyxy, image_whwh)
    losses = jax.tree_util.tree_map(jax.block_until_ready, losses)

    ref = _reference(pred_logits, pred_boxes, match_gt, tgt_labels,
                     tgt_boxes_cxcywh, tgt_boxes_xyxy, image_whwh)

    for name in ("loss_ce", "loss_bbox", "loss_giou"):
        np.testing.assert_allclose(np.asarray(losses[name]), np.asarray(ref[name]),
                                   rtol=1e-4, atol=1e-4)

    print("KERNEL_OK")
</pallas_src>

<mosaic_0001>
module attributes {stable_mosaic.version = 11 : i64} {
  func.func @_criterion_kernel(%arg0: i32, %arg1: memref<1x32x8xbf16, #tpu.memory_space<vmem>>, %arg2: memref<1x8x32xf32, #tpu.memory_space<vmem>>, %arg3: memref<1x32x1xi32, #tpu.memory_space<vmem>>, %arg4: memref<1x1x32xi32, #tpu.memory_space<vmem>>, %arg5: memref<1x16x1xi32, #tpu.memory_space<vmem>>, %arg6: memref<1x8x16xf32, #tpu.memory_space<vmem>>, %arg7: memref<1x4xf32, #tpu.memory_space<smem>>) attributes {dimension_semantics = [#tpu.dimension_semantics<arbitrary>], iteration_bounds = array<i64: 1>, scalar_prefetch = 0 : i64, scratch_operands = 0 : i64, tpu.core_type = #tpu.core_type<tc>, window_params = [{transform_indices = @transform_0, window_bounds = array<i64: 1, 32, 8>}, {transform_indices = @transform_1, window_bounds = array<i64: 1, 8, 32>}, {transform_indices = @transform_2, window_bounds = array<i64: 1, 32, 1>}, {transform_indices = @transform_3, window_bounds = array<i64: 1, 1, 32>}, {transform_indices = @transform_4, window_bounds = array<i64: 1, 16, 1>}, {transform_indices = @transform_5, window_bounds = array<i64: 1, 8, 16>}, {transform_indices = @transform_6, window_bounds = array<i64: 1, 4>}]} {
    %c0 = arith.constant 0 : index
    %c0_0 = arith.constant 0 : index
    %c0_1 = arith.constant 0 : index
    %0 = vector.load %arg1[%c0, %c0_0, %c0_1] : memref<1x32x8xbf16, #tpu.memory_space<vmem>>, vector<1x32x8xbf16>
    %1 = vector.shape_cast %0 : vector<1x32x8xbf16> to vector<32x8xbf16>
    %2 = arith.extf %1 : vector<32x8xbf16> to vector<32x8xf32>
    %c0_2 = arith.constant 0 : index
    %c0_3 = arith.constant 0 : index
    %c0_4 = arith.constant 0 : index
    %3 = vector.load %arg2[%c0_2, %c0_3, %c0_4] : memref<1x8x32xf32, #tpu.memory_space<vmem>>, vector<1x8x32xf32>
    %4 = vector.shape_cast %3 : vector<1x8x32xf32> to vector<8x32xf32>
    %c0_5 = arith.constant 0 : index
    %c0_6 = arith.constant 0 : index
    %c0_7 = arith.constant 0 : index
    %5 = vector.load %arg3[%c0_5, %c0_6, %c0_7] : memref<1x32x1xi32, #tpu.memory_space<vmem>>, vector<1x32x1xi32>
    %6 = vector.shape_cast %5 : vector<1x32x1xi32> to vector<32x1xi32>
    %c0_8 = arith.constant 0 : index
    %c0_9 = arith.constant 0 : index
    %c0_10 = arith.constant 0 : index
    %7 = vector.load %arg4[%c0_8, %c0_9, %c0_10] : memref<1x1x32xi32, #tpu.memory_space<vmem>>, vector<1x1x32xi32>
    %8 = vector.shape_cast %7 : vector<1x1x32xi32> to vector<1x32xi32>
    %c0_11 = arith.constant 0 : index
    %c0_12 = arith.constant 0 : index
    %c0_13 = arith.constant 0 : index
    %9 = vector.load %arg5[%c0_11, %c0_12, %c0_13] : memref<1x16x1xi32, #tpu.memory_space<vmem>>, vector<1x16x1xi32>
    %10 = vector.shape_cast %9 : vector<1x16x1xi32> to vector<16x1xi32>
    %c0_14 = arith.constant 0 : index
    %c0_15 = arith.constant 0 : index
    %c0_16 = arith.constant 0 : index
    %11 = vector.load %arg6[%c0_14, %c0_15, %c0_16] : memref<1x8x16xf32, #tpu.memory_space<vmem>>, vector<1x8x16xf32>
    %12 = vector.shape_cast %11 : vector<1x8x16xf32> to vector<8x16xf32>
    %13 = tpu.iota {dimensions = array<i32: 1>} : vector<32x16xi32>
    %14 = vector.broadcast %6 : vector<32x1xi32> to vector<32x16xi32>
    %15 = arith.cmpi eq, %14, %13 : vector<32x16xi32>
    %16 = arith.extui %15 : vector<32x16xi1> to vector<32x16xi32>
    %17 = arith.sitofp %16 : vector<32x16xi32> to vector<32x16xf32>
    %18 = arith.truncf %17 : vector<32x16xf32> to vector<32x16xbf16>
    %19 = tpu.iota {dimensions = array<i32: 1>} : vector<16x8xi32>
    %20 = vector.broadcast %10 : vector<16x1xi32> to vector<16x8xi32>
    %21 = arith.cmpi eq, %20, %19 : vector<16x8xi32>
    %22 = arith.extui %21 : vector<16x8xi1> to vector<16x8xi32>
    %23 = arith.sitofp %22 : vector<16x8xi32> to vector<16x8xf32>
    %24 = arith.truncf %23 : vector<16x8xf32> to vector<16x8xbf16>
    %cst = arith.constant dense<0.000000e+00> : vector<32x8xf32>
    %25 = tpu.matmul %18, %24, %cst {dimension_numbers = #tpu.dot_dimension_numbers<[1], [0], [0], [1], [0, 0, 1, 1], [], []>} : vector<32x16xbf16>, vector<16x8xbf16>, vector<32x8xf32> -> vector<32x8xf32>
    %26 = arith.negf %2 : vector<32x8xf32>
    %27 = math.exp %26 : vector<32x8xf32>
    %cst_17 = arith.constant 1.000000e+00 : f32
    %28 = vector.broadcast %cst_17 : f32 to vector<32x8xf32>
    %29 = arith.addf %28, %27 : vector<32x8xf32>
    %30 = arith.divf %28, %29 : vector<32x8xf32>
    %cst_18 = arith.constant 0.000000e+00 : f32
    %31 = vector.broadcast %cst_18 : f32 to vector<32x8xf32>
    %32 = arith.maximumf %2, %31 : vector<32x8xf32>
    %33 = arith.mulf %2, %25 : vector<32x8xf32>
    %34 = arith.subf %32, %33 : vector<32x8xf32>
    %cst_19 = arith.constant 1.000000e+00 : f32
    %35 = vector.broadcast %cst_19 : f32 to vector<32x8xf32>
    %36 = arith.subf %35, %30 : vector<32x8xf32>
    %37 = arith.maximumf %30, %36 : vector<32x8xf32>
    %38 = math.log %37 : vector<32x8xf32>
    %39 = arith.subf %34, %38 : vector<32x8xf32>
    %cst_20 = arith.constant 2.000000e+00 : f32
    %40 = vector.broadcast %cst_20 : f32 to vector<32x8xf32>
    %41 = arith.mulf %40, %30 : vector<32x8xf32>
    %cst_21 = arith.constant 1.000000e+00 : f32
    %42 = vector.broadcast %cst_21 : f32 to vector<32x8xf32>
    %43 = arith.subf %42, %41 : vector<32x8xf32>
    %44 = arith.mulf %25, %43 : vector<32x8xf32>
    %45 = arith.addf %30, %44 : vector<32x8xf32>
    %46 = arith.mulf %45, %45 : vector<32x8xf32>
    %47 = arith.mulf %39, %46 : vector<32x8xf32>
    %cst_22 = arith.constant -5.000000e-01 : f32
    %48 = vector.broadcast %cst_22 : f32 to vector<32x8xf32>
    %49 = arith.mulf %48, %25 : vector<32x8xf32>
    %cst_23 = arith.constant 7.500000e-01 : f32
    %50 = vector.broadcast %cst_23 : f32 to vector<32x8xf32>
    %51 = arith.addf %50, %49 : vector<32x8xf32>
    %52 = arith.mulf %47, %51 : vector<32x8xf32>
    %53 = vector.shape_cast %52 : vector<32x8xf32> to vector<1x32x8xf32>
    %cst_24 = arith.constant dense<0.000000e+00> : vector<1xf32>
    %54 = vector.multi_reduction <add>, %53, %cst_24 [1, 2] : vector<1x32x8xf32> to vector<1xf32>
    %55 = vector.shape_cast %54 : vector<1xf32> to vector<1x1x1xf32>
    %56 = vector.extract %55[0, 0, 0] : f32 from vector<1x1x1xf32>
    %57 = tpu.iota {dimensions = array<i32: 0>} : vector<16x32xi32>
    %58 = vector.broadcast %8 : vector<1x32xi32> to vector<16x32xi32>
    %59 = arith.cmpi eq, %58, %57 : vector<16x32xi32>
    %60 = arith.extui %59 : vector<16x32xi1> to vector<16x32xi32>
    %61 = arith.sitofp %60 : vector<16x32xi32> to vector<16x32xf32>
    %cst_25 = arith.constant dense<0.000000e+00> : vector<8x32xf32>
    %62 = tpu.matmul %12, %61, %cst_25 {dimension_numbers = #tpu.dot_dimension_numbers<[1], [0], [0], [1], [0, 0, 1, 1], [], []>} : vector<8x16xf32>, vector<16x32xf32>, vector<8x32xf32> -> vector<8x32xf32>
    %c0_i32 = arith.constant 0 : i32
    %63 = vector.broadcast %c0_i32 : i32 to vector<1x32xi32>
    %64 = arith.cmpi sge, %8, %63 : vector<1x32xi32>
    %65 = arith.extui %64 : vector<1x32xi1> to vector<1x32xi32>
    %66 = arith.sitofp %65 : vector<1x32xi32> to vector<1x32xf32>
    %67 = vector.extract_strided_slice %4 {offsets = [4, 0], sizes = [4, 32], strides = [1, 1]} : vector<8x32xf32> to vector<4x32xf32>
    %68 = vector.extract_strided_slice %62 {offsets = [0, 0], sizes = [4, 32], strides = [1, 1]} : vector<8x32xf32> to vector<4x32xf32>
    %69 = arith.subf %67, %68 : vector<4x32xf32>
    %70 = math.absf %69 : vector<4x32xf32>
    %cst_26 = arith.constant dense<0.000000e+00> : vector<32xf32>
    %71 = vector.multi_reduction <add>, %70, %cst_26 [0] : vector<4x32xf32> to vector<32xf32>
    %72 = vector.shape_cast %71 : vector<32xf32> to vector<1x32xf32>
    %73 = arith.mulf %72, %66 : vector<1x32xf32>
    %74 = vector.shape_cast %73 : vector<1x32xf32> to vector<1x1x32xf32>
    %cst_27 = arith.constant dense<0.000000e+00> : vector<1xf32>
    %75 = vector.multi_reduction <add>, %74, %cst_27 [1, 2] : vector<1x1x32xf32> to vector<1xf32>
    %76 = vector.shape_cast %75 : vector<1xf32> to vector<1x1x1xf32>
    %77 = vector.extract %76[0, 0, 0] : f32 from vector<1x1x1xf32>
    %78 = vector.extract_strided_slice %4 {offsets = [0, 0], sizes = [1, 32], strides = [1, 1]} : vector<8x32xf32> to vector<1x32xf32>
    %79 = vector.extract_strided_slice %4 {offsets = [1, 0], sizes = [1, 32], strides = [1, 1]} : vector<8x32xf32> to vector<1x32xf32>
    %80 = vector.extract_strided_slice %4 {offsets = [2, 0], sizes = [1, 32], strides = [1, 1]} : vector<8x32xf32> to vector<1x32xf32>
    %81 = vector.extract_strided_slice %4 {offsets = [3, 0], sizes = [1, 32], strides = [1, 1]} : vector<8x32xf32> to vector<1x32xf32>
    %82 = vector.extract_strided_slice %62 {offsets = [4, 0], sizes = [1, 32], strides = [1, 1]} : vector<8x32xf32> to vector<1x32xf32>
    %83 = vector.extract_strided_slice %62 {offsets = [5, 0], sizes = [1, 32], strides = [1, 1]} : vector<8x32xf32> to vector<1x32xf32>
    %84 = vector.extract_strided_slice %62 {offsets = [6, 0], sizes = [1, 32], strides = [1, 1]} : vector<8x32xf32> to vector<1x32xf32>
    %85 = vector.extract_strided_slice %62 {offsets = [7, 0], sizes = [1, 32], strides = [1, 1]} : vector<8x32xf32> to vector<1x32xf32>
    %86 = arith.subf %80, %78 : vector<1x32xf32>
    %87 = arith.subf %81, %79 : vector<1x32xf32>
    %88 = arith.mulf %86, %87 : vector<1x32xf32>
    %89 = arith.subf %84, %82 : vector<1x32xf32>
    %90 = arith.subf %85, %83 : vector<1x32xf32>
    %91 = arith.mulf %89, %90 : vector<1x32xf32>
    %92 = arith.minimumf %80, %84 : vector<1x32xf32>
    %93 = arith.maximumf %78, %82 : vector<1x32xf32>
    %94 = arith.subf %92, %93 : vector<1x32xf32>
    %cst_28 = arith.constant 0.000000e+00 : f32
    %95 = vector.broadcast %cst_28 : f32 to vector<1x32xf32>
    %96 = arith.maximumf %94, %95 : vector<1x32xf32>
    %97 = arith.minimumf %81, %85 : vector<1x32xf32>
    %98 = arith.maximumf %79, %83 : vector<1x32xf32>
    %99 = arith.subf %97, %98 : vector<1x32xf32>
    %cst_29 = arith.constant 0.000000e+00 : f32
    %100 = vector.broadcast %cst_29 : f32 to vector<1x32xf32>
    %101 = arith.maximumf %99, %100 : vector<1x32xf32>
    %102 = arith.mulf %96, %101 : vector<1x32xf32>
    %103 = arith.addf %88, %91 : vector<1x32xf32>
    %104 = arith.subf %103, %102 : vector<1x32xf32>
    %105 = arith.divf %102, %104 : vector<1x32xf32>
    %106 = arith.maximumf %80, %84 : vector<1x32xf32>
    %107 = arith.minimumf %78, %82 : vector<1x32xf32>
    %108 = arith.subf %106, %107 : vector<1x32xf32>
    %109 = arith.maximumf %81, %85 : vector<1x32xf32>
    %110 = arith.minimumf %79, %83 : vector<1x32xf32>
    %111 = arith.subf %109, %110 : vector<1x32xf32>
    %112 = arith.mulf %108, %111 : vector<1x32xf32>
    %113 = arith.subf %112, %104 : vector<1x32xf32>
    %114 = arith.divf %113, %112 : vector<1x32xf32>
    %115 = arith.subf %105, %114 : vector<1x32xf32>
    %cst_30 = arith.constant 1.000000e+00 : f32
    %116 = vector.broadcast %cst_30 : f32 to vector<1x32xf32>
    %117 = arith.subf %116, %115 : vector<1x32xf32>
    %cst_31 = arith.constant 0.000000e+00 : f32
    %118 = vector.broadcast %cst_31 : f32 to vector<1x32xf32>
    %119 = arith.select %64, %117, %118 : vector<1x32xi1>, vector<1x32xf32>
    %120 = vector.shape_cast %119 : vector<1x32xf32> to vector<1x1x32xf32>
    %cst_32 = arith.constant dense<0.000000e+00> : vector<1xf32>
    %121 = vector.multi_reduction <add>, %120, %cst_32 [1, 2] : vector<1x1x32xf32> to vector<1xf32>
    %122 = vector.shape_cast %121 : vector<1xf32> to vector<1x1x1xf32>
    %123 = vector.extract %122[0, 0, 0] : f32 from vector<1x1x1xf32>
    %124 = vector.shape_cast %66 : vector<1x32xf32> to vector<1x1x32xf32>
    %cst_33 = arith.constant dense<0.000000e+00> : vector<1xf32>
    %125 = vector.multi_reduction <add>, %124, %cst_33 [1, 2] : vector<1x1x32xf32> to vector<1xf32>
    %126 = vector.shape_cast %125 : vector<1xf32> to vector<1x1x1xf32>
    %127 = vector.extract %126[0, 0, 0] : f32 from vector<1x1x1xf32>
    %128 = arith.index_cast %arg0 : i32 to index
    %c0_34 = arith.constant 0 : index
    %129 = memref.load %arg7[%128, %c0_34] : memref<1x4xf32, #tpu.memory_space<smem>>
    memref.store %56, %arg7[%128, %c0_34] : memref<1x4xf32, #tpu.memory_space<smem>>
    %130 = arith.index_cast %arg0 : i32 to index
    %c1 = arith.constant 1 : index
    %131 = memref.load %arg7[%130, %c1] : memref<1x4xf32, #tpu.memory_space<smem>>
    memref.store %77, %arg7[%130, %c1] : memref<1x4xf32, #tpu.memory_space<smem>>
    %132 = arith.index_cast %arg0 : i32 to index
    %c2 = arith.constant 2 : index
    %133 = memref.load %arg7[%132, %c2] : memref<1x4xf32, #tpu.memory_space<smem>>
    memref.store %123, %arg7[%132, %c2] : memref<1x4xf32, #tpu.memory_space<smem>>
    %134 = arith.index_cast %arg0 : i32 to index
    %c3 = arith.constant 3 : index
    %135 = memref.load %arg7[%134, %c3] : memref<1x4xf32, #tpu.memory_space<smem>>
    memref.store %127, %arg7[%134, %c3] : memref<1x4xf32, #tpu.memory_space<smem>>
    return
  }
  func.func @transform_0(%arg0: i32) -> (i32, i32, i32) {
    %c0_i32 = arith.constant 0 : i32
    %c0_i32_0 = arith.constant 0 : i32
    %c0_i32_1 = arith.constant 0 : i32
    return %arg0, %c0_i32, %c0_i32_0 : i32, i32, i32
  }
  func.func @transform_1(%arg0: i32) -> (i32, i32, i32) {
    %c0_i32 = arith.constant 0 : i32
    %c0_i32_0 = arith.constant 0 : i32
    %c0_i32_1 = arith.constant 0 : i32
    return %arg0, %c0_i32, %c0_i32_0 : i32, i32, i32
  }
  func.func @transform_2(%arg0: i32) -> (i32, i32, i32) {
    %c0_i32 = arith.constant 0 : i32
    %c0_i32_0 = arith.constant 0 : i32
    %c0_i32_1 = arith.constant 0 : i32
    return %arg0, %c0_i32, %c0_i32_0 : i32, i32, i32
  }
  func.func @transform_3(%arg0: i32) -> (i32, i32, i32) {
    %c0_i32 = arith.constant 0 : i32
    %c0_i32_0 = arith.constant 0 : i32
    %c0_i32_1 = arith.constant 0 : i32
    return %arg0, %c0_i32, %c0_i32_0 : i32, i32, i32
  }
  func.func @transform_4(%arg0: i32) -> (i32, i32, i32) {
    %c0_i32 = arith.constant 0 : i32
    %c0_i32_0 = arith.constant 0 : i32
    %c0_i32_1 = arith.constant 0 : i32
    return %arg0, %c0_i32, %c0_i32_0 : i32, i32, i32
  }
  func.func @transform_5(%arg0: i32) -> (i32, i32, i32) {
    %c0_i32 = arith.constant 0 : i32
    %c0_i32_0 = arith.constant 0 : i32
    %c0_i32_1 = arith.constant 0 : i32
    return %arg0, %c0_i32, %c0_i32_0 : i32, i32, i32
  }
  func.func @transform_6(%arg0: i32) -> (i32, i32) {
    %c0_i32 = arith.constant 0 : i32
    %c0_i32_0 = arith.constant 0 : i32
    %c0_i32_1 = arith.constant 0 : i32
    return %c0_i32, %c0_i32_0 : i32, i32
  }
}

</mosaic_0001>

<llo_original>
// kernel: tpu_custom_call.1
$region0: #{tpu_custom_call.1}
  #allocation0 [shape = 'u32[]', space=smem, size = 0x4, offset = 0x4, fixed_abs, tag = 'smem constant byte address 0x4 - core index']
  #allocation1 [shape = 'u32[144,128]{1,0:T(1,128)}', space=vmem, size = 0x12000, scoped, tag = 'internal scratch']
  %s0 = inlined_call_operand.vmem [shape: bf16[1,32,8], index: 0, kind: input, shape index: {}]
  %s1 = inlined_call_operand.vmem [shape: f32[1,8,32], index: 1, kind: input, shape index: {}]
  %s2 = inlined_call_operand.vmem [shape: s32[1,32,1], index: 2, kind: input, shape index: {}]
  %s3 = inlined_call_operand.vmem [shape: s32[1,1,32], index: 3, kind: input, shape index: {}]
  %s4 = inlined_call_operand.vmem [shape: s32[1,16,1], index: 4, kind: input, shape index: {}]
  %s5 = inlined_call_operand.vmem [shape: f32[1,8,16], index: 5, kind: input, shape index: {}]
  %s6 = inlined_call_operand.hbm [shape: f32[1,4], index: 6, kind: output, shape index: {}]
  %s7 = sld [smem:[#allocation0]]
  $region34: #{tpu_custom_call.1} parent=0
    _
  %s9 = ssub.s32 1, %s7
  %s10 = scalar_select 0, %s9, %s7
  $region1: #{tpu_custom_call.1} parent=0
    #allocation2 [shape = 'u8[512]{0}', space=smem, size = 0x200, scoped, tag = 'output window, operand 0, single buffered']
    #allocation3 [shape = 's32[1]{0}', space=sflag, size = 0x4, scoped, tag = 'scoped memory for tpu_custom_call.1']
    %11 = vsyncpa [#allocation3], 0
    // Predicated region
    $region2: #{tpu_custom_call.1} parent=1 // pred_check
      _
    $region3: #{tpu_custom_call.1} parent=1 // pred_check_branch
      %13 = sbr.rel (0) target = $region5
    $region4: #{tpu_custom_call.1} parent=1 // pred_region
      _
    $region5: #{tpu_custom_call.1} parent=1 // pred_fallthru
      _
    // Predicated region
    $region6: #{tpu_custom_call.1} parent=1 // pred_check
      _
    $region7: #{tpu_custom_call.1} parent=1 // pred_check_branch
      %15 = sbr.rel (0) target = $region9
    $region8: #{tpu_custom_call.1} parent=1 // pred_region
      _
    $region9: #{tpu_custom_call.1} parent=1 // pred_fallthru
      _
    // Predicated region
    $region10: #{tpu_custom_call.1} parent=1 // pred_check
      _
    $region11: #{tpu_custom_call.1} parent=1 // pred_check_branch
      %17 = sbr.rel (0) target = $region13
    $region12: #{tpu_custom_call.1} parent=1 // pred_region
      _
    $region13: #{tpu_custom_call.1} parent=1 // pred_fallthru
      _
    // Predicated region
    $region14: #{tpu_custom_call.1} parent=1 // pred_check
      _
    $region15: #{tpu_custom_call.1} parent=1 // pred_check_branch
      %19 = sbr.rel (0) target = $region17
    $region16: #{tpu_custom_call.1} parent=1 // pred_region
      _
    $region17: #{tpu_custom_call.1} parent=1 // pred_fallthru
      _
    // Predicated region
    $region18: #{tpu_custom_call.1} parent=1 // pred_check
      _
    $region19: #{tpu_custom_call.1} parent=1 // pred_check_branch
      %21 = sbr.rel (0) target = $region21
    $region20: #{tpu_custom_call.1} parent=1 // pred_region
      _
    $region21: #{tpu_custom_call.1} parent=1 // pred_fallthru
      _
    // Predicated region
    $region22: #{tpu_custom_call.1} parent=1 // pred_check
      _
    $region23: #{tpu_custom_call.1} parent=1 // pred_check_branch
      %23 = sbr.rel (0) target = $region25
    $region24: #{tpu_custom_call.1} parent=1 // pred_region
      _
    $region25: #{tpu_custom_call.1} parent=1 // pred_fallthru
      _
    %v25 = vld [vmem:[%s0] sm:$0xf]
    %v26 = vld [vmem:[%s0 + $0x4] sm:$0xf]
    %v27 = vld [vmem:[%s0 + $0x8] sm:$0xf]
    %v28 = vld [vmem:[%s0 + $0xc] sm:$0xf]
    %v29 = vunpack.c.l.bf16 %v25
    %v30 = vunpack.c.l.bf16 %v26
    %v31 = vunpack.c.l.bf16 %v27
    %v32 = vunpack.c.l.bf16 %v28
    %v33 = vld [vmem:[%s1] sm:$0xff]
    %v34 = vld [vmem:[%s2] sm:$0xff]
    %v35 = vld [vmem:[%s2 + $0x8] sm:$0xff]
    %v36 = vld [vmem:[%s2 + $0x10] sm:$0xff]
    %v37 = vld [vmem:[%s2 + $0x18] sm:$0xff]
    %v38 = vld [vmem:[%s3] sm:$0x1]
    %v39 = vld [vmem:[%s4] sm:$0xff]
    %v40 = vld [vmem:[%s4 + $0x8] sm:$0xff]
    %v41 = vld [vmem:[%s5] sm:$0xff]
    %v42 = vlaneseq
    %v43 = vand.u32 %v42, 127
    %44 = vset.pattern.permute.xlu0 0
    %45 = vperm.xlu0 %44, %v34
    %v46 = vpop.permute.xlu0 %45
    %47 = vset.pattern.permute.xlu0 0
    %48 = vperm.xlu0 %47, %v35
    %v49 = vpop.permute.xlu0 %48
    %50 = vset.pattern.permute.xlu0 0
    %51 = vperm.xlu0 %50, %v36
    %v52 = vpop.permute.xlu0 %51
    %53 = vset.pattern.permute.xlu0 0
    %54 = vperm.xlu0 %53, %v37
    %v55 = vpop.permute.xlu0 %54
    %vm56 = vcmp.eq.s32.totalorder %v46, %v43
    %vm57 = vcmp.eq.s32.totalorder %v49, %v43
    %vm58 = vcmp.eq.s32.totalorder %v52, %v43
    %vm59 = vcmp.eq.s32.totalorder %v55, %v43
    %v60 = vsel %vm56, 1, 0
    %v61 = vsel %vm57, 1, 0
    %v62 = vsel %vm58, 1, 0
    %v63 = vsel %vm59, 1, 0
    %v64 = vcvt.s32.f32 %v60
    %v65 = vcvt.s32.f32 %v61
    %v66 = vcvt.s32.f32 %v62
    %v67 = vcvt.s32.f32 %v63
    %v68 = vpack.c.bf16 %v65, %v64
    %v69 = vpack.c.bf16 %v67, %v66
    %70 = vset.pattern.permute.xlu0 0
    %71 = vperm.xlu0 %70, %v39
    %v72 = vpop.permute.xlu0 %71
    %73 = vset.pattern.permute.xlu0 0
    %74 = vperm.xlu0 %73, %v40
    %v75 = vpop.permute.xlu0 %74
    %vm76 = vcmp.eq.s32.totalorder %v72, %v43
    %vm77 = vcmp.eq.s32.totalorder %v75, %v43
    %v78 = vsel %vm76, 1, 0
    %v79 = vsel %vm77, 1, 0
    %v80 = vcvt.s32.f32 %v78
    %v81 = vcvt.s32.f32 %v79
    %v82 = vpack.c.bf16 %v81, %v80
    %vm83 = vcmask 130048
    %v85 = vsel %vm83, %v68, 0
    %v88 = vsel %vm83, %v69, 0
    %90 = vmatprep.subr.bf16.mxu0 0
    %91 = vmatpush1.bf16.msra.mxu0 0
    %92 = vmatprep.subr.bf16.mxu0 0
    %93 = vmatpush1.bf16.msra.mxu0 0
    %94 = vmatprep.subr.bf16.mxu0 0
    %95 = vmatpush1.bf16.msra.mxu0 0
    %96 = vmatprep.subr.bf16.mxu0 0
    %97 = vmatpush1.bf16.msra.mxu0 0
    %98 = vmatprep.subr.bf16.mxu0 0
    %99 = vmatpush1.bf16.msra.mxu0 0
    %100 = vmatprep.subr.bf16.mxu0 0
    %101 = vmatpush1.bf16.msra.mxu0 0
    %102 = vmatprep.subr.bf16.mxu0 0
    %103 = vmatpush1.bf16.msra.mxu0 0
    %104 = vmatprep.subr.bf16.mxu0 0
    %105 = vmatpush1.bf16.msra.mxu0 %v82
    %106 = vmatprep.subr.bf16.mxu0 0
    %107 = vmatpush2.bf16.msra.mxu0 0
    %108 = vmatprep.subr.bf16.mxu0 0
    %109 = vmatpush2.bf16.msra.mxu0 0
    %110 = vmatprep.subr.bf16.mxu0 0
    %111 = vmatpush2.bf16.msra.mxu0 0
    %112 = vmatprep.subr.bf16.mxu0 0
    %113 = vmatpush2.bf16.msra.mxu0 0
    %114 = vmatprep.subr.bf16.mxu0 0
    %115 = vmatpush2.bf16.msra.mxu0 0
    %116 = vmatprep.subr.bf16.mxu0 0
    %117 = vmatpush2.bf16.msra.mxu0 0
    %118 = vmatprep.subr.bf16.mxu0 0
    %119 = vmatpush2.bf16.msra.mxu0 0
    %120 = vmatprep.subr.bf16.mxu0 0
    %121 = vmatpush2.bf16.msra.mxu0 0
    %122 = vmatprep.mubr.bf16.mxu0 0
    %123 = vmatmul.mubr.bf16.gmra.mxu0 %v85
    %v124 = vpop.f32.mrf.mxu0
    %v125 = vadd.f32 0.0, %v124
    %v126 = vpop.f32.mrf.mxu0
    %v127 = vpop.f32.mrf.mxu0
    %v128 = vadd.f32 0.0, %v127
    %v129 = vpop.f32.mrf.mxu0
    %130 = vmatprep.mubr.bf16.mxu0 0
    %131 = vmatmul.mubr.bf16.gmra.mxu0 %v88
    %v132 = vpop.f32.mrf.mxu0
    %v133 = vadd.f32 0.0, %v132
    %v134 = vpop.f32.mrf.mxu0
    %v135 = vpop.f32.mrf.mxu0
    %v136 = vadd.f32 0.0, %v135
    %v137 = vpop.f32.mrf.mxu0
    %138 = vdwg.mxu0
    %v139 = vxor.u32 %v29, 2147483648
    %v140 = vxor.u32 %v30, 2147483648
    %v141 = vxor.u32 %v31, 2147483648
    %v142 = vxor.u32 %v32, 2147483648
    %v143 = vmul.f32 %v139, 1.442695
    %v144 = vpow.pop %v143
    %v145 = vmul.f32 %v140, 1.442695
    %v146 = vpow.pop %v145
    %v147 = vmul.f32 %v141, 1.442695
    %v148 = vpow.pop %v147
    %v149 = vmul.f32 %v142, 1.442695
    %v150 = vpow.pop %v149
    %v151 = vadd.f32 %v144, 1.0
    %v152 = vadd.f32 %v146, 1.0
    %v153 = vadd.f32 %v148, 1.0
    %v154 = vadd.f32 %v150, 1.0
    %v155 = vrcp.pop %v151
    %v156 = vmul.f32 1.0, %v155
    %v157 = vrcp.pop %v152
    %v158 = vmul.f32 1.0, %v157
    %v159 = vrcp.pop %v153
    %v160 = vmul.f32 1.0, %v159
    %v161 = vrcp.pop %v154
    %v162 = vmul.f32 1.0, %v161
    %v163 = vmax.f32 %v29, 0.0
    %v164 = vmax.f32 %v30, 0.0
    %v165 = vmax.f32 %v31, 0.0
    %v166 = vmax.f32 %v32, 0.0
    %v167 = vmul.f32 %v29, %v125
    %v168 = vmul.f32 %v30, %v128
    %v169 = vmul.f32 %v31, %v133
    %v170 = vmul.f32 %v32, %v136
    %v171 = vsub.f32 %v163, %v167
    %v172 = vsub.f32 %v164, %v168
    %v173 = vsub.f32 %v165, %v169
    %v174 = vsub.f32 %v166, %v170
    %v175 = vsub.f32 1.0, %v156
    %v176 = vsub.f32 1.0, %v158
    %v177 = vsub.f32 1.0, %v160
    %v178 = vsub.f32 1.0, %v162
    %v179 = vmax.f32 %v156, %v175
    %v180 = vmax.f32 %v158, %v176
    %v181 = vmax.f32 %v160, %v177
    %v182 = vmax.f32 %v162, %v178
    %v183 = vlog2.pop %v179
    %v184 = vmul.f32 %v183, 0.6931472
    %v185 = vlog2.pop %v180
    %v186 = vmul.f32 %v185, 0.6931472
    %v187 = vlog2.pop %v181
    %v188 = vmul.f32 %v187, 0.6931472
    %v189 = vlog2.pop %v182
    %v190 = vmul.f32 %v189, 0.6931472
    %v191 = vsub.f32 %v171, %v184
    %v192 = vsub.f32 %v172, %v186
    %v193 = vsub.f32 %v173, %v188
    %v194 = vsub.f32 %v174, %v190
    %v195 = vmul.f32 %v156, 2.0
    %v196 = vmul.f32 %v158, 2.0
    %v197 = vmul.f32 %v160, 2.0
    %v198 = vmul.f32 %v162, 2.0
    %v199 = vsub.f32 1.0, %v195
    %v200 = vsub.f32 1.0, %v196
    %v201 = vsub.f32 1.0, %v197
    %v202 = vsub.f32 1.0, %v198
    %v203 = vmul.f32 %v125, %v199
    %v204 = vmul.f32 %v128, %v200
    %v205 = vmul.f32 %v133, %v201
    %v206 = vmul.f32 %v136, %v202
    %v207 = vadd.f32 %v156, %v203
    %v208 = vadd.f32 %v158, %v204
    %v209 = vadd.f32 %v160, %v205
    %v210 = vadd.f32 %v162, %v206
    %v211 = vmul.f32 %v207, %v207
    %v212 = vmul.f32 %v208, %v208
    %v213 = vmul.f32 %v209, %v209
    %v214 = vmul.f32 %v210, %v210
    %v215 = vmul.f32 %v191, %v211
    %v216 = vmul.f32 %v192, %v212
    %v217 = vmul.f32 %v193, %v213
    %v218 = vmul.f32 %v194, %v214
    %v219 = vmul.f32 %v125, -0.5
    %v220 = vmul.f32 %v128, -0.5
    %v221 = vmul.f32 %v133, -0.5
    %v222 = vmul.f32 %v136, -0.5
    %v223 = vadd.f32 %v219, 0.75
    %v224 = vadd.f32 %v220, 0.75
    %v225 = vadd.f32 %v221, 0.75
    %v226 = vadd.f32 %v222, 0.75
    %v227 = vmul.f32 %v215, %v223
    %v228 = vmul.f32 %v216, %v224
    %v229 = vmul.f32 %v217, %v225
    %v230 = vmul.f32 %v218, %v226
    %vm231 = vcmask 64512
    %v232 = vsel %vm231, %v227, 0.0
    %v233 = vsel %vm231, %v228, 0.0
    %v234 = vadd.f32 %v232, %v233
    %v235 = vsel %vm231, %v229, 0.0
    %v236 = vadd.f32 %v234, %v235
    %v237 = vsel %vm231, %v230, 0.0
    %v238 = vadd.f32 %v236, %v237
    %239 = vadd.xlane.f32.xlu0 %v238
    %v240 = vpop.xlane.xlu0 %239
    %v241 = vrot.slane %v240, 4
    %v242 = vadd.f32 %v240, %v241
    %v243 = vrot.slane %v242, 2
    %v244 = vadd.f32 %v242, %v243
    %v245 = vrot.slane %v244, 1
    %v246 = vadd.f32 %v244, %v245
    %s247 = vtos %v246
    %v248 = vlaneseq
    %v249 = vshrl.u32 %v248, 7
    %v250 = vadd.s32 %v249, 8
    %v251 = vlaneseq
    %v252 = vshrl.u32 %v251, 7
    %v253 = vsub.s32 0, %v252
    %v254 = vrot.slane %v38, %v253
    %vm255 = vcmp.eq.s32.totalorder %v254, %v249
    %vm256 = vcmp.eq.s32.totalorder %v254, %v250
    %v257 = vsel %vm255, 1, 0
    %v258 = vsel %vm256, 1, 0
    %v259 = vcvt.s32.f32 %v257
    %v260 = vcvt.s32.f32 %v258
    %v262 = vsel %vm83, %v41, 0
    %264 = vmatprep.subr.mxu0 0.0
    %265 = vmatpush1.msra.mxu0 0.0
    %266 = vmatprep.subr.mxu0 0.0
    %267 = vmatpush1.msra.mxu0 0.0
    %268 = vmatprep.subr.mxu0 0.0
    %269 = vmatpush1.msra.mxu0 0.0
    %270 = vmatprep.subr.mxu0 0.0
    %271 = vmatpush1.msra.mxu0 0.0
    %272 = vmatprep.subr.mxu0 0.0
    %273 = vmatpush1.msra.mxu0 0.0
    %274 = vmatprep.subr.mxu0 0.0
    %275 = vmatpush1.msra.mxu0 0.0
    %276 = vmatprep.subr.mxu0 0.0
    %277 = vmatpush1.msra.mxu0 0.0
    %278 = vmatprep.subr.mxu0 0.0
    %279 = vmatpush1.msra.mxu0 0.0
    %280 = vmatprep.subr.mxu0 0.0
    %281 = vmatpush1.msra.mxu0 0.0
    %282 = vmatprep.subr.mxu0 0.0
    %283 = vmatpush1.msra.mxu0 0.0
    %284 = vmatprep.subr.mxu0 0.0
    %285 = vmatpush1.msra.mxu0 0.0
    %286 = vmatprep.subr.mxu0 0.0
    %287 = vmatpush1.msra.mxu0 0.0
    %288 = vmatprep.subr.mxu0 0.0
    %289 = vmatpush1.msra.mxu0 0.0
    %290 = vmatprep.subr.mxu0 0.0
    %291 = vmatpush1.msra.mxu0 0.0
    %292 = vmatprep.subr.mxu0 0.0
    %293 = vmatpush1.msra.mxu0 %v260
    %294 = vmatprep.subr.mxu0 0.0
    %295 = vmatpush1.msra.mxu0 %v259
    %296 = vmatprep.subr.mxu0 0.0
    %297 = vmatpush2.msra.mxu0 0.0
    %298 = vmatprep.subr.mxu0 0.0
    %299 = vmatpush2.msra.mxu0 0.0
    %300 = vmatprep.subr.mxu0 0.0
    %301 = vmatpush2.msra.mxu0 0.0
    %302 = vmatprep.subr.mxu0 0.0
    %303 = vmatpush2.msra.mxu0 0.0
    %304 = vmatprep.subr.mxu0 0.0
    %305 = vmatpush2.msra.mxu0 0.0
    %306 = vmatprep.subr.mxu0 0.0
    %307 = vmatpush2.msra.mxu0 0.0
    %308 = vmatprep.subr.mxu0 0.0
    %309 = vmatpush2.msra.mxu0 0.0
    %310 = vmatprep.subr.mxu0 0.0
    %311 = vmatpush2.msra.mxu0 0.0
    %312 = vmatprep.subr.mxu0 0.0
    %313 = vmatpush2.msra.mxu0 0.0
    %314 = vmatprep.subr.mxu0 0.0
    %315 = vmatpush2.msra.mxu0 0.0
    %316 = vmatprep.subr.mxu0 0.0
    %317 = vmatpush2.msra.mxu0 0.0
    %318 = vmatprep.subr.mxu0 0.0
    %319 = vmatpush2.msra.mxu0 0.0
    %320 = vmatprep.subr.mxu0 0.0
    %321 = vmatpush2.msra.mxu0 0.0
    %322 = vmatprep.subr.mxu0 0.0
    %323 = vmatpush2.msra.mxu0 0.0
    %324 = vmatprep.subr.mxu0 0.0
    %325 = vmatpush2.msra.mxu0 0.0
    %326 = vmatprep.subr.mxu0 0.0
    %327 = vmatpush2.msra.mxu0 0.0
    %328 = vmatprep.mubr.f32.mxu0 0.0
    %329 = vmatmul.mubr.f32.gmra.mxu0 %v262
    %v330 = vpop.f32.mrf.mxu0
    %v331 = vadd.f32 0.0, %v330
    %v332 = vpop.f32.mrf.mxu0
    %333 = vdwg.mxu0
    %vm334 = vcmp.ge.s32.totalorder %v38, 0
    %v335 = vsel %vm334, 1, 0
    %v336 = vcvt.s32.f32 %v335
    %v338 = vrot.slane %v331, 4
    %v340 = vsub.f32 %v33, %v338
    %v341 = vand.u32 2147483647, %v340
    %v343 = vrot.slane %v341, 4
    %vm345 = vcmask 257024
    %v346 = vsel %vm345, %v343, 0.0
    %v347 = vrot.slane %v346, 4
    %v348 = vadd.f32 %v346, %v347
    %v349 = vrot.slane %v348, 2
    %v350 = vadd.f32 %v348, %v349
    %v351 = vrot.slane %v350, 1
    %v352 = vadd.f32 %v350, %v351
    %v353 = vmul.f32 %v352, %v336
    %vm354 = vcmask 253952
    %v355 = vsel %vm354, %v353, 0.0
    %356 = vadd.xlane.f32.xlu0 %v355
    %v357 = vpop.xlane.xlu0 %356
    %v358 = vrot.slane %v357, 4
    %v359 = vadd.f32 %v357, %v358
    %v360 = vrot.slane %v359, 2
    %v361 = vadd.f32 %v359, %v360
    %v362 = vrot.slane %v361, 1
    %v363 = vadd.f32 %v361, %v362
    %s364 = vtos %v363
    %v366 = vrot.slane %v33, 6
    %v368 = vsub.f32 %v33, %v366
    %v370 = vrot.slane %v368, 1
    %v372 = vmul.f32 %v368, %v370
    %v373 = vrot.slane %v331, 6
    %v375 = vsub.f32 %v331, %v373
    %v377 = vrot.slane %v375, 1
    %v379 = vmul.f32 %v375, %v377
    %v380 = vmin.f32 %v33, %v338
    %v381 = vmax.f32 %v33, %v338
    %v383 = vrot.slane %v381, 6
    %v385 = vsub.f32 %v380, %v383
    %v386 = vmax.f32 %v385, 0.0
    %v388 = vrot.slane %v386, 1
    %v390 = vmul.f32 %v386, %v388
    %v392 = vrot.slane %v379, 4
    %v394 = vadd.f32 %v372, %v392
    %v395 = vsub.f32 %v394, %v390
    %v396 = vrcp.pop %v395
    %v397 = vmul.f32 %v390, %v396
    %v399 = vrot.slane %v380, 6
    %v401 = vsub.f32 %v381, %v399
    %v403 = vrot.slane %v401, 1
    %v405 = vmul.f32 %v401, %v403
    %v406 = vsub.f32 %v405, %v395
    %v407 = vrcp.pop %v405
    %v408 = vmul.f32 %v406, %v407
    %v409 = vsub.f32 %v397, %v408
    %v410 = vsub.f32 1.0, %v409
    %v413 = vunpack.c.l.s4 1966171168
    %v414 = vunpack.c.0.s8 %v413
    %v415 = vlaneseq
    %v416 = vshrl.u32 %v415, 7
    %v417 = vsub.s32 %v414, %v416
    %v418 = vrot.slane %v410, %v417
    %v420 = vunpack.c.l.s4 1966171168
    %v421 = vunpack.c.0.s8 %v420
    %v422 = vlaneseq
    %v423 = vshrl.u32 %v422, 7
    %v424 = vsub.s32 %v421, %v423
    %v425 = vrot.slane %v418, %v424
    %v426 = vcombine.high %v425, %v425
    %v428 = vsel %vm334, %v426, 0.0
    %v429 = vsel %vm354, %v428, 0.0
    %430 = vadd.xlane.f32.xlu0 %v429
    %v431 = vpop.xlane.xlu0 %430
    %v432 = vrot.slane %v431, 4
    %v433 = vadd.f32 %v431, %v432
    %v434 = vrot.slane %v433, 2
    %v435 = vadd.f32 %v433, %v434
    %v436 = vrot.slane %v435, 1
    %v437 = vadd.f32 %v435, %v436
    %s438 = vtos %v437
    %v439 = vsel %vm354, %v336, 0.0
    %440 = vadd.xlane.f32.xlu0 %v439
    %v441 = vpop.xlane.xlu0 %440
    %v442 = vrot.slane %v441, 4
    %v443 = vadd.f32 %v441, %v442
    %v444 = vrot.slane %v443, 2
    %v445 = vadd.f32 %v443, %v444
    %v446 = vrot.slane %v445, 1
    %v447 = vadd.f32 %v445, %v446
    %s448 = vtos %v447
    %s449 = smul.u32 0, 128
    %s450 = scalar_lea.smem [#allocation2], %s449
    %451 = sst [smem:[%s450]] %s247
    %s452 = sadd.s32 %s449, 1
    %s453 = scalar_lea.smem [#allocation2], %s452
    %454 = sst [smem:[%s453]] %s364
    %s455 = sadd.s32 %s449, 2
    %s456 = scalar_lea.smem [#allocation2], %s455
    %457 = sst [smem:[%s456]] %s438
    %s458 = sadd.s32 %s449, 3
    %s459 = scalar_lea.smem [#allocation2], %s458
    %460 = sst [smem:[%s459]] %s448
    // Predicated region
    $region26: #{tpu_custom_call.1} parent=1 // pred_check
      _
    $region27: #{tpu_custom_call.1} parent=1 // pred_check_branch
      %462 = sbr.rel (0) target = $region29
    $region28: #{tpu_custom_call.1} parent=1 // pred_region
      %s464 = ssub.s32 16, 16
      %465 = vsyncadd [#allocation3], %s464
      %468 = dma.smem_to_hbm [#allocation2], 16, %s6, [#allocation3]
    $region29: #{tpu_custom_call.1} parent=1 // pred_fallthru
      _
    // Predicated region
    $region30: #{tpu_custom_call.1} parent=1 // pred_check
      _
    $region31: #{tpu_custom_call.1} parent=1 // pred_check_branch
      %470 = sbr.rel (0) target = $region33
    $region32: #{tpu_custom_call.1} parent=1 // pred_region
      %471 = dma.done [#allocation3], 16
    $region33: #{tpu_custom_call.1} parent=1 // pred_fallthru
      _
    %472 = sfence
    %473 = vsyncpa [#allocation3], 1

</llo_original>
